<compile_context>
chip_gen: v7x
topology: tpu7x:2x2x1
jax: 0.10.0
libtpu: 0.0.40
codegen_flags: <defaults>
</compile_context>

<pallas_src>
import functools

import jax
import jax.numpy as jnp
from jax import lax
from jax.experimental import pallas as pl
from jax.experimental.pallas import tpu as pltpu

BN_EPS = 1e-5
LANE = 128
SUBLANE = 8
MAX_TILE_B = 512  # batch rows per tile in the large-batch (two-pass) path


def _round_up(n, m):
    return ((n + m - 1) // m) * m


# ---------------------------------------------------------------------------
# One-time parameter preparation (hoisted out of the per-call path).
# ---------------------------------------------------------------------------
def prepare_params(gamma, weight):
    """gamma: (D,) BN weight; weight: (C, D) Linear weight (no bias).

    Returns:
      gamma_2d : (1, D)  f32   (beta dropped: BNClassifier freezes it at 0)
      wt_p     : (D, Cp) bf16  pre-transposed, class dim zero-padded to a
                 multiple of 128 so the in-kernel score store is lane-dense.
                 Padded columns are zero, so they contribute nothing and are
                 sliced off by the wrapper.
    """
    D = gamma.shape[0]
    C = weight.shape[0]
    Cp = _round_up(C, LANE)
    gamma_2d = gamma.reshape(1, D).astype(jnp.float32)
    wt_p = jnp.zeros((D, Cp), jnp.bfloat16).at[:, :C].set(
        jnp.transpose(weight).astype(jnp.bfloat16))
    return gamma_2d, wt_p


# ---------------------------------------------------------------------------
# Kernels.
# ---------------------------------------------------------------------------
def _fused_kernel(x_ref, gamma_ref, wt_ref, feat_ref, score_ref):
    """Small-batch path: BN stats + normalize + classify in one kernel."""
    x = x_ref[...].astype(jnp.float32)
    # Training-mode BatchNorm1d: batch mean + biased variance per feature.
    mean = jnp.mean(x, axis=0, keepdims=True)
    centered = x - mean
    var = jnp.mean(centered * centered, axis=0, keepdims=True)
    scale = gamma_ref[...] * lax.rsqrt(var + BN_EPS)  # gamma * inv_std (beta == 0)
    feat = centered * scale
    feat_ref[...] = feat.astype(feat_ref.dtype)
    # MXU: bf16 inputs, f32 accumulation.
    score_ref[...] = jnp.dot(
        feat.astype(jnp.bfloat16), wt_ref[...],
        preferred_element_type=jnp.float32).astype(score_ref.dtype)


def _stats_kernel(x_ref, gamma_ref, mean_ref, scale_ref, *, batch, tile_b):
    """Pass 1 (large batch): streaming per-feature sum / sum-of-squares.

    The (1, D) output blocks have constant index maps, so they stay
    VMEM-resident across B-tiles and act as accumulators; at the last grid
    step they are finalized to mean and the folded scale gamma*rsqrt(var+eps).
    """
    i = pl.program_id(0)

    @pl.when(i == 0)
    def _():
        mean_ref[...] = jnp.zeros_like(mean_ref)
        scale_ref[...] = jnp.zeros_like(scale_ref)

    x = x_ref[...].astype(jnp.float32)
    # Mask rows past the true batch size (partial last tile reads garbage).
    row = i * tile_b + lax.broadcasted_iota(jnp.int32, x.shape, 0)
    x = jnp.where(row < batch, x, 0.0)

    mean_ref[...] += jnp.sum(x, axis=0, keepdims=True)       # running sum
    scale_ref[...] += jnp.sum(x * x, axis=0, keepdims=True)  # running sum of squares

    @pl.when(i == pl.num_programs(0) - 1)
    def _():
        inv_b = 1.0 / batch
        s1 = mean_ref[...]
        s2 = scale_ref[...]
        mean = s1 * inv_b
        var = s2 * inv_b - mean * mean                        # biased variance
        mean_ref[...] = mean
        scale_ref[...] = gamma_ref[...] * lax.rsqrt(var + BN_EPS)


def _apply_kernel(x_ref, mean_ref, scale_ref, wt_ref, feat_ref, score_ref):
    """Pass 2 (large batch): normalize + classify one B-tile.

    The B grid axis is 'parallel' (both TensorCores on v7x); mean/scale/wt use
    constant index maps so they are DMA'd once and stay resident.
    """
    x = x_ref[...].astype(jnp.float32)
    feat = (x - mean_ref[...]) * scale_ref[...]
    feat_ref[...] = feat.astype(feat_ref.dtype)
    score_ref[...] = jnp.dot(
        feat.astype(jnp.bfloat16), wt_ref[...],
        preferred_element_type=jnp.float32).astype(score_ref.dtype)


# ---------------------------------------------------------------------------
# Wrapper.
# ---------------------------------------------------------------------------
def bn_classifier(x, gamma_2d, wt_p, class_num):
    """x: (B, D). Returns (feature (B, D), cls_score (B, class_num))."""
    B, D = x.shape
    Cp = wt_p.shape[1]
    out_dtype = x.dtype
    out_isz = jnp.dtype(out_dtype).itemsize

    # Per-step VMEM working set for a B-tile of `tb` rows: double-buffered
    # x/feat/score tiles + resident bf16 weight + (1, D) stat vectors.
    def tile_bytes(tb):
        per_step = tb * D * 4 + tb * D * out_isz + tb * Cp * out_isz
        return 2 * per_step + D * Cp * 2 + 4 * D * 4

    if B <= MAX_TILE_B:
        # --- Small batch: one fused kernel, single grid point. -------------
        vlim = max(8 * 1024 * 1024, 2 * tile_bytes(B))
        feat, score_p = pl.pallas_call(
            _fused_kernel,
            out_shape=(jax.ShapeDtypeStruct((B, D), out_dtype),
                       jax.ShapeDtypeStruct((B, Cp), out_dtype)),
            grid=(1,),
            in_specs=[pl.BlockSpec((B, D), lambda i: (0, 0)),
                      pl.BlockSpec((1, D), lambda i: (0, 0)),
                      pl.BlockSpec((D, Cp), lambda i: (0, 0))],
            out_specs=(pl.BlockSpec((B, D), lambda i: (0, 0)),
                       pl.BlockSpec((B, Cp), lambda i: (0, 0))),
            compiler_params=pltpu.CompilerParams(vmem_limit_bytes=vlim),
        )(x, gamma_2d, wt_p)
    else:
        # --- Large batch: two-pass streaming design. ------------------------
        tb = MAX_TILE_B
        while tb > SUBLANE and tile_bytes(tb) > 16 * 1024 * 1024:
            tb //= 2  # re-budget the tile for v7x's 64 MiB VMEM
        nb = pl.cdiv(B, tb)
        vlim = min(64 * 1024 * 1024, max(8 * 1024 * 1024, 2 * tile_bytes(tb)))
        # TODO(synk): very wide in_dim / class_num would additionally need
        # tiling of D / Cp (second "parallel" axis); not implemented here.

        # Pass 1: streaming sum / sum-of-squares -> mean, folded scale.
        mean, scale = pl.pallas_call(
            functools.partial(_stats_kernel, batch=B, tile_b=tb),
            out_shape=(jax.ShapeDtypeStruct((1, D), jnp.float32),
                       jax.ShapeDtypeStruct((1, D), jnp.float32)),
            grid=(nb,),
            in_specs=[pl.BlockSpec((tb, D), lambda i: (i, 0)),
                      pl.BlockSpec((1, D), lambda i: (0, 0))],
            out_specs=(pl.BlockSpec((1, D), lambda i: (0, 0)),
                       pl.BlockSpec((1, D), lambda i: (0, 0))),
            compiler_params=pltpu.CompilerParams(
                dimension_semantics=("arbitrary",),
                vmem_limit_bytes=vlim),
        )(x, gamma_2d)

        # Pass 2: normalize + classify; parallel B axis.
        feat, score_p = pl.pallas_call(
            _apply_kernel,
            out_shape=(jax.ShapeDtypeStruct((B, D), out_dtype),
                       jax.ShapeDtypeStruct((B, Cp), out_dtype)),
            grid=(nb,),
            in_specs=[pl.BlockSpec((tb, D), lambda i: (i, 0)),
                      pl.BlockSpec((1, D), lambda i: (0, 0)),
                      pl.BlockSpec((1, D), lambda i: (0, 0)),
                      pl.BlockSpec((D, Cp), lambda i: (0, 0))],
            out_specs=(pl.BlockSpec((tb, D), lambda i: (i, 0)),
                       pl.BlockSpec((tb, Cp), lambda i: (i, 0))),
            compiler_params=pltpu.CompilerParams(
                dimension_semantics=("parallel",),
                vmem_limit_bytes=vlim),
        )(x, mean, scale, wt_p)

    # feature is already in its final shape/dtype (no extra HBM pass); only
    # the small lane-padded score needs a slice.
    return feat, score_p[:, :class_num]


# TODO(synk): eval-mode BatchNorm (running_mean / running_var use + update) is
# not implemented; only the module's default training-mode forward is covered.


def _reference(x, gamma, weight):
    xf = x.astype(jnp.float32)
    mean = jnp.mean(xf, axis=0, keepdims=True)
    var = jnp.mean((xf - mean) ** 2, axis=0, keepdims=True)
    feat = (xf - mean) * lax.rsqrt(var + BN_EPS) * gamma
    score = feat @ weight.astype(jnp.float32).T
    return feat, score


if __name__ == "__main__":
    key = jax.random.PRNGKey(0)
    k_x, k_w, k_x2 = jax.random.split(key, 3)

    in_dim, class_num = 32, 16
    # Parameter init, matching BNClassifier._init_params:
    #   BN weight = 1, BN bias = 0 (frozen, folded away), Linear ~ N(0, 0.001).
    gamma = jnp.ones((in_dim,), dtype=jnp.float32)
    weight = 0.001 * jax.random.normal(k_w, (class_num, in_dim), dtype=jnp.float32)
    gamma_2d, wt_p = prepare_params(gamma, weight)

    # --- Small-batch (fused single-kernel) path. ---------------------------
    B = 8
    x = jax.random.normal(k_x, (B, in_dim), dtype=jnp.float32)
    feature, cls_score = bn_classifier(x, gamma_2d, wt_p, class_num)
    jax.block_until_ready((feature, cls_score))

    feat_ref, score_ref = _reference(x, gamma, weight)
    assert feature.shape == (B, in_dim) and cls_score.shape == (B, class_num)
    assert jnp.allclose(feature, feat_ref, atol=1e-4, rtol=1e-4)
    # Classifier path is bf16-MXU with f32 accumulation -> looser tolerance.
    assert jnp.allclose(cls_score, score_ref, atol=1e-3, rtol=2e-2)

    # --- Large-batch (two-pass tiled) path, incl. a partial last B-tile. ---
    B2 = 1050
    x2 = jax.random.normal(k_x2, (B2, in_dim), dtype=jnp.float32)
    feature2, cls_score2 = bn_classifier(x2, gamma_2d, wt_p, class_num)
    jax.block_until_ready((feature2, cls_score2))

    feat_ref2, score_ref2 = _reference(x2, gamma, weight)
    assert feature2.shape == (B2, in_dim) and cls_score2.shape == (B2, class_num)
    assert jnp.allclose(feature2, feat_ref2, atol=1e-3, rtol=1e-3)
    assert jnp.allclose(cls_score2, score_ref2, atol=1e-3, rtol=2e-2)

    print("KERNEL_OK")
</pallas_src>

<mosaic_0001>
module attributes {stable_mosaic.version = 11 : i64} {
  func.func @_fused_kernel(%arg0: i32, %arg1: memref<8x32xf32, #tpu.memory_space<vmem>>, %arg2: memref<1x32xf32, #tpu.memory_space<vmem>>, %arg3: memref<32x128xbf16, #tpu.memory_space<vmem>>, %arg4: memref<8x32xf32, #tpu.memory_space<vmem>>, %arg5: memref<8x128xf32, #tpu.memory_space<vmem>>) attributes {dimension_semantics = [#tpu.dimension_semantics<arbitrary>], iteration_bounds = array<i64: 1>, scalar_prefetch = 0 : i64, scratch_operands = 0 : i64, tpu.core_type = #tpu.core_type<tc>, window_params = [{pipeline_mode = #tpu.pipeline_mode<synchronous>, transform_indices = @transform_0, window_bounds = array<i64: 8, 32>}, {pipeline_mode = #tpu.pipeline_mode<synchronous>, transform_indices = @transform_1, window_bounds = array<i64: 1, 32>}, {pipeline_mode = #tpu.pipeline_mode<synchronous>, transform_indices = @transform_2, window_bounds = array<i64: 32, 128>}, {pipeline_mode = #tpu.pipeline_mode<synchronous>, transform_indices = @transform_3, window_bounds = array<i64: 8, 32>}, {pipeline_mode = #tpu.pipeline_mode<synchronous>, transform_indices = @transform_4, window_bounds = array<i64: 8, 128>}]} {
    %c0 = arith.constant 0 : index
    %c0_0 = arith.constant 0 : index
    %0 = vector.load %arg1[%c0, %c0_0] : memref<8x32xf32, #tpu.memory_space<vmem>>, vector<8x32xf32>
    %cst = arith.constant dense<0.000000e+00> : vector<32xf32>
    %1 = vector.multi_reduction <add>, %0, %cst [0] : vector<8x32xf32> to vector<32xf32>
    %2 = vector.shape_cast %1 : vector<32xf32> to vector<1x32xf32>
    %cst_1 = arith.constant 8.000000e+00 : f32
    %3 = vector.broadcast %cst_1 : f32 to vector<1x32xf32>
    %4 = arith.divf %2, %3 : vector<1x32xf32>
    %5 = vector.broadcast %4 : vector<1x32xf32> to vector<8x32xf32>
    %6 = arith.subf %0, %5 : vector<8x32xf32>
    %7 = arith.mulf %6, %6 : vector<8x32xf32>
    %cst_2 = arith.constant dense<0.000000e+00> : vector<32xf32>
    %8 = vector.multi_reduction <add>, %7, %cst_2 [0] : vector<8x32xf32> to vector<32xf32>
    %9 = vector.shape_cast %8 : vector<32xf32> to vector<1x32xf32>
    %cst_3 = arith.constant 8.000000e+00 : f32
    %10 = vector.broadcast %cst_3 : f32 to vector<1x32xf32>
    %11 = arith.divf %9, %10 : vector<1x32xf32>
    %c0_4 = arith.constant 0 : index
    %c0_5 = arith.constant 0 : index
    %12 = vector.load %arg2[%c0_4, %c0_5] : memref<1x32xf32, #tpu.memory_space<vmem>>, vector<1x32xf32>
    %cst_6 = arith.constant 9.99999974E-6 : f32
    %13 = vector.broadcast %cst_6 : f32 to vector<1x32xf32>
    %14 = arith.addf %11, %13 : vector<1x32xf32>
    %15 = math.rsqrt %14 : vector<1x32xf32>
    %16 = arith.mulf %12, %15 : vector<1x32xf32>
    %17 = vector.broadcast %16 : vector<1x32xf32> to vector<8x32xf32>
    %18 = arith.mulf %6, %17 : vector<8x32xf32>
    %c0_7 = arith.constant 0 : index
    %c0_8 = arith.constant 0 : index
    %19 = vector.load %arg4[%c0_7, %c0_8] : memref<8x32xf32, #tpu.memory_space<vmem>>, vector<8x32xf32>
    tpu.vector_store %arg4[%c0_7, %c0_8], %18 {strides = array<i32>} : memref<8x32xf32, #tpu.memory_space<vmem>>, vector<8x32xf32>,
    %20 = arith.truncf %18 : vector<8x32xf32> to vector<8x32xbf16>
    %c0_9 = arith.constant 0 : index
    %c0_10 = arith.constant 0 : index
    %21 = vector.load %arg3[%c0_9, %c0_10] : memref<32x128xbf16, #tpu.memory_space<vmem>>, vector<32x128xbf16>
    %cst_11 = arith.constant dense<0.000000e+00> : vector<8x128xf32>
    %22 = tpu.matmul %20, %21, %cst_11 {dimension_numbers = #tpu.dot_dimension_numbers<[1], [0], [0], [1], [0, 0, 1, 1], [], []>} : vector<8x32xbf16>, vector<32x128xbf16>, vector<8x128xf32> -> vector<8x128xf32>
    %c0_12 = arith.constant 0 : index
    %c0_13 = arith.constant 0 : index
    %23 = vector.load %arg5[%c0_12, %c0_13] : memref<8x128xf32, #tpu.memory_space<vmem>>, vector<8x128xf32>
    tpu.vector_store %arg5[%c0_12, %c0_13], %22 {strides = array<i32>} : memref<8x128xf32, #tpu.memory_space<vmem>>, vector<8x128xf32>,
    return
  }
  func.func @transform_0(%arg0: i32) -> (i32, i32) {
    %c0_i32 = arith.constant 0 : i32
    %c0_i32_0 = arith.constant 0 : i32
    %c0_i32_1 = arith.constant 0 : i32
    return %c0_i32, %c0_i32_0 : i32, i32
  }
  func.func @transform_1(%arg0: i32) -> (i32, i32) {
    %c0_i32 = arith.constant 0 : i32
    %c0_i32_0 = arith.constant 0 : i32
    %c0_i32_1 = arith.constant 0 : i32
    return %c0_i32, %c0_i32_0 : i32, i32
  }
  func.func @transform_2(%arg0: i32) -> (i32, i32) {
    %c0_i32 = arith.constant 0 : i32
    %c0_i32_0 = arith.constant 0 : i32
    %c0_i32_1 = arith.constant 0 : i32
    return %c0_i32, %c0_i32_0 : i32, i32
  }
  func.func @transform_3(%arg0: i32) -> (i32, i32) {
    %c0_i32 = arith.constant 0 : i32
    %c0_i32_0 = arith.constant 0 : i32
    %c0_i32_1 = arith.constant 0 : i32
    return %c0_i32, %c0_i32_0 : i32, i32
  }
  func.func @transform_4(%arg0: i32) -> (i32, i32) {
    %c0_i32 = arith.constant 0 : i32
    %c0_i32_0 = arith.constant 0 : i32
    %c0_i32_1 = arith.constant 0 : i32
    return %c0_i32, %c0_i32_0 : i32, i32
  }
}

</mosaic_0001>

<llo_original>
// kernel: tpu_custom_call.1
$region0: #{tpu_custom_call.1}
  #allocation0 [shape = 'u32[]', space=smem, size = 0x4, offset = 0x4, fixed_abs, tag = 'smem constant byte address 0x4 - core index']
  #allocation1 [shape = 'u32[144,128]{1,0:T(1,128)}', space=vmem, size = 0x12000, scoped, tag = 'internal scratch']
  %s0 = inlined_call_operand.hbm [shape: f32[8,32], index: 0, kind: input, shape index: {}]
  %s1 = inlined_call_operand.vmem [shape: f32[1,32], index: 1, kind: input, shape index: {}]
  %s2 = inlined_call_operand.hbm [shape: bf16[32,128], index: 2, kind: input, shape index: {}]
  %s3 = inlined_call_operand.hbm [shape: f32[8,32], index: 3, kind: output, shape index: {0}]
  %s4 = inlined_call_operand.hbm [shape: f32[8,128], index: 4, kind: output, shape index: {1}]
  %5 = xla_tuple %s3, %s4
  %s6 = sld [smem:[#allocation0]]
  $region38: #{tpu_custom_call.1} parent=0
    _
  %s8 = ssub.s32 1, %s6
  %s9 = scalar_select 0, %s8, %s6
  $region1: #{tpu_custom_call.1} parent=0
    #allocation2 [shape = 'u8[4096]{0}', space=vmem, size = 0x1000, scoped, tag = 'input window, operand 0, single buffered']
    #allocation3 [shape = 's32[1]{0}', space=sflag, size = 0x4, scoped, tag = 'scoped memory for tpu_custom_call.1']
    #allocation4 [shape = 's32[1]{0}', space=sflag, size = 0x4, scoped, tag = 'scoped memory for tpu_custom_call.1']
    #allocation5 [shape = 'u8[8192]{0}', space=vmem, size = 0x2000, scoped, tag = 'input window, operand 2, single buffered']
    #allocation6 [shape = 's32[1]{0}', space=sflag, size = 0x4, scoped, tag = 'scoped memory for tpu_custom_call.1']
    #allocation7 [shape = 'u8[4096]{0}', space=vmem, size = 0x1000, scoped, tag = 'output window, operand 0, single buffered']
    #allocation8 [shape = 'u8[4096]{0}', space=vmem, size = 0x1000, scoped, tag = 'output window, operand 1, single buffered']
    #allocation9 [shape = 's32[1]{0}', space=sflag, size = 0x4, scoped, tag = 'scoped memory for tpu_custom_call.1']
    %10 = vsyncpa [#allocation3], 0
    %11 = vsyncpa [#allocation6], 0
    %12 = vsyncpa [#allocation4], 0
    %13 = vsyncpa [#allocation9], 0
    // Predicated region
    $region2: #{tpu_custom_call.1} parent=1 // pred_check
      _
    $region3: #{tpu_custom_call.1} parent=1 // pred_check_branch
      %15 = sbr.rel (0) target = $region5
    $region4: #{tpu_custom_call.1} parent=1 // pred_region
      %s17 = ssub.s32 128, 128
      %18 = vsyncadd [#allocation3], %s17
      %s20 = sshll.u32 [#allocation2], 4
      %s21 = int_to_ptr.vmem [resolvable:$true] %s20
      %23 = dma.hbm_to_vmem [thread:$0]  %s0, 128, %s21, [#allocation3]
    $region5: #{tpu_custom_call.1} parent=1 // pred_fallthru
      _
    // Predicated region
    $region6: #{tpu_custom_call.1} parent=1 // pred_check
      _
    $region7: #{tpu_custom_call.1} parent=1 // pred_check_branch
      %25 = sbr.rel (0) target = $region9
    $region8: #{tpu_custom_call.1} parent=1 // pred_region
      _
    $region9: #{tpu_custom_call.1} parent=1 // pred_fallthru
      _
    // Predicated region
    $region10: #{tpu_custom_call.1} parent=1 // pred_check
      _
    $region11: #{tpu_custom_call.1} parent=1 // pred_check_branch
      %27 = sbr.rel (0) target = $region13
    $region12: #{tpu_custom_call.1} parent=1 // pred_region
      %s29 = ssub.s32 256, 256
      %30 = vsyncadd [#allocation6], %s29
      %s31 = sshll.u32 [#allocation5], 4
      %s32 = int_to_ptr.vmem [resolvable:$true] %s31
      %37 = dma.hbm_to_vmem [thread:$0]  %s2, 256, %s32, [#allocation6], 64, 64, 4
    $region13: #{tpu_custom_call.1} parent=1 // pred_fallthru
      _
    // Predicated region
    $region14: #{tpu_custom_call.1} parent=1 // pred_check
      _
    $region15: #{tpu_custom_call.1} parent=1 // pred_check_branch
      %39 = sbr.rel (0) target = $region17
    $region16: #{tpu_custom_call.1} parent=1 // pred_region
      %40 = dma.done [#allocation3], 128
    $region17: #{tpu_custom_call.1} parent=1 // pred_fallthru
      _
    // Predicated region
    $region18: #{tpu_custom_call.1} parent=1 // pred_check
      _
    $region19: #{tpu_custom_call.1} parent=1 // pred_check_branch
      %42 = sbr.rel (0) target = $region21
    $region20: #{tpu_custom_call.1} parent=1 // pred_region
      %43 = dma.done [#allocation6], 256
    $region21: #{tpu_custom_call.1} parent=1 // pred_fallthru
      _
    %v45 = vld [vmem:[#allocation2] sm:$0xff]
    %vm46 = vcmask 261120
    %v47 = vsel %vm46, %v45, 0.0
    %v48 = vrot.slane %v47, 4
    %v49 = vadd.f32 %v47, %v48
    %v50 = vrot.slane %v49, 2
    %v51 = vadd.f32 %v49, %v50
    %v52 = vrot.slane %v51, 1
    %v53 = vadd.f32 %v51, %v52
    %v54 = vrcp.pop 8.0
    %v55 = vmul.f32 %v53, %v54
    %v56 = vsub.f32 %v45, %v55
    %v57 = vmul.f32 %v56, %v56
    %v58 = vsel %vm46, %v57, 0.0
    %v59 = vrot.slane %v58, 4
    %v60 = vadd.f32 %v58, %v59
    %v61 = vrot.slane %v60, 2
    %v62 = vadd.f32 %v60, %v61
    %v63 = vrot.slane %v62, 1
    %v64 = vadd.f32 %v62, %v63
    %v65 = vmul.f32 %v64, %v54
    %v66 = vld [vmem:[%s1] sm:$0x1]
    %v67 = vadd.f32 %v65, 1e-05
    %v68 = vrsqrt.pop %v67
    %v69 = vmul.f32 %v66, %v68
    %v71 = vlaneseq
    %v72 = vshrl.u32 %v71, 7
    %v73 = vsub.s32 0, %v72
    %v74 = vrot.slane %v69, %v73
    %v76 = vmul.f32 %v56, %v74
    %77 = vst.msk [vmem:[#allocation7] sm:$0xff] %vm46, %v76
    %v78 = vpack.c.bf16 %v76, %v76
    %v79 = vld [vmem:[#allocation5] sm:$0xf]
    %v80 = vld [vmem:[#allocation5 + $0x4] sm:$0xf]
    %v81 = vld [vmem:[#allocation5 + $0x8] sm:$0xf]
    %v82 = vld [vmem:[#allocation5 + $0xc] sm:$0xf]
    %v87 = vunpack.c.l.b16 %v79
    %v88 = vunpack.c.l.b16 %v80
    %v89 = vunpack.c.l.b16 %v81
    %v90 = vunpack.c.l.b16 %v82
    %v91 = vpack.c.b16 %v88, %v87
    %v92 = vpack.c.b16 %v90, %v89
    %v96 = vsel %vm46, %v78, 0
    %98 = vmatprep.subr.bf16.mxu0 0
    %99 = vmatpush1.bf16.msra.mxu0 %v91
    %100 = vmatprep.subr.bf16.mxu0 0
    %101 = vmatpush1.bf16.msra.mxu0 %v92
    %102 = vmatprep.subr.bf16.mxu0 0
    %103 = vmatpush1.bf16.msra.mxu0 0
    %104 = vmatprep.subr.bf16.mxu0 0
    %105 = vmatpush1.bf16.msra.mxu0 0
    %106 = vmatprep.subr.bf16.mxu0 0
    %107 = vmatpush1.bf16.msra.mxu0 0
    %108 = vmatprep.subr.bf16.mxu0 0
    %109 = vmatpush1.bf16.msra.mxu0 0
    %110 = vmatprep.subr.bf16.mxu0 0
    %111 = vmatpush1.bf16.msra.mxu0 0
    %112 = vmatprep.subr.bf16.mxu0 0
    %113 = vmatpush1.bf16.msra.mxu0 0
    %114 = vmatprep.subr.bf16.mxu0 0
    %115 = vmatpush1.bf16.msra.mxu0 0
    %116 = vmatprep.subr.bf16.mxu0 0
    %117 = vmatpush1.bf16.msra.mxu0 0
    %118 = vmatprep.subr.bf16.mxu0 0
    %119 = vmatpush1.bf16.msra.mxu0 0
    %120 = vmatprep.subr.bf16.mxu0 0
    %121 = vmatpush1.bf16.msra.mxu0 0
    %122 = vmatprep.subr.bf16.mxu0 0
    %123 = vmatpush1.bf16.msra.mxu0 0
    %124 = vmatprep.subr.bf16.mxu0 0
    %125 = vmatpush1.bf16.msra.mxu0 0
    %126 = vmatprep.subr.bf16.mxu0 0
    %127 = vmatpush1.bf16.msra.mxu0 0
    %128 = vmatprep.subr.bf16.mxu0 0
    %129 = vmatpush1.bf16.msra.mxu0 0
    %130 = vmatprep.mubr.bf16.mxu0 0
    %131 = vmatmul.mubr.bf16.gmra.mrb[0].mxu0 %v96
    %v132 = vpop.f32.mrb[0].mxu0
    %v133 = vadd.f32 0.0, %v132
    %v134 = vpop.f32.mrb[0].mxu0
    %v135 = vpop.f32.mrb[0].mxu0
    %v136 = vpop.f32.mrb[0].mxu0
    %137 = vdwg.mxu0
    %138 = vst [vmem:[#allocation8] sm:$0xff] %v133
    // Predicated region
    $region22: #{tpu_custom_call.1} parent=1 // pred_check
      _
    $region23: #{tpu_custom_call.1} parent=1 // pred_check_branch
      %140 = sbr.rel (0) target = $region25
    $region24: #{tpu_custom_call.1} parent=1 // pred_region
      %s142 = ssub.s32 128, 128
      %143 = vsyncadd [#allocation4], %s142
      %s145 = sshll.u32 [#allocation7], 4
      %s146 = int_to_ptr.vmem [resolvable:$true] %s145
      %148 = dma.vmem_to_hbm [thread:$0]  %s146, 128, %s3, [#allocation4]
    $region25: #{tpu_custom_call.1} parent=1 // pred_fallthru
      _
    // Predicated region
    $region26: #{tpu_custom_call.1} parent=1 // pred_check
      _
    $region27: #{tpu_custom_call.1} parent=1 // pred_check_branch
      %150 = sbr.rel (0) target = $region29
    $region28: #{tpu_custom_call.1} parent=1 // pred_region
      %s152 = ssub.s32 128, 128
      %153 = vsyncadd [#allocation9], %s152
      %s155 = sshll.u32 [#allocation8], 4
      %s156 = int_to_ptr.vmem [resolvable:$true] %s155
      %158 = dma.vmem_to_hbm [thread:$0]  %s156, 128, %s4, [#allocation9]
    $region29: #{tpu_custom_call.1} parent=1 // pred_fallthru
      _
    // Predicated region
    $region30: #{tpu_custom_call.1} parent=1 // pred_check
      _
    $region31: #{tpu_custom_call.1} parent=1 // pred_check_branch
      %160 = sbr.rel (0) target = $region33
    $region32: #{tpu_custom_call.1} parent=1 // pred_region
      %161 = dma.done [#allocation4], 128
    $region33: #{tpu_custom_call.1} parent=1 // pred_fallthru
      _
    // Predicated region
    $region34: #{tpu_custom_call.1} parent=1 // pred_check
      _
    $region35: #{tpu_custom_call.1} parent=1 // pred_check_branch
      %163 = sbr.rel (0) target = $region37
    $region36: #{tpu_custom_call.1} parent=1 // pred_region
      %164 = dma.done [#allocation9], 128
    $region37: #{tpu_custom_call.1} parent=1 // pred_fallthru
      _
    %165 = vsyncpa [#allocation3], 1
    %166 = vsyncpa [#allocation6], 1
    %167 = vsyncpa [#allocation4], 1
    %168 = vsyncpa [#allocation9], 1

</llo_original>
